<compile_context>
chip_gen: v7x
topology: tpu7x:2x2x1
jax: 0.10.0
libtpu: 0.0.40
codegen_flags: <defaults>
</compile_context>

<pallas_src>
import functools
import numpy as np
import jax
import jax.numpy as jnp
from jax import lax
from jax.experimental import pallas as pl
from jax.experimental.pallas import tpu as pltpu


def _fps_kernel(pos_ref, start_ref, cent_ref, dist_ref, *, npoint, n_valid):
    # pos_ref  : (3, B, Np) f32  -- x/y/z planes, points along the lane axis
    # start_ref: (B, 1)    i32   -- first "farthest" index per batch
    # cent_ref : (npoint, B, 1) i32 output (wrapper transposes to (B, npoint))
    # dist_ref : (B, Np)   f32   -- VMEM scratch: running min squared distance
    _, B, Np = pos_ref.shape

    # Padded lanes get distance -1 so they can never win the argmax
    # (valid distances are always >= 0).
    lane0 = lax.broadcasted_iota(jnp.int32, (B, Np), 1)
    dist_ref[...] = jnp.where(lane0 < n_valid, jnp.float32(1e10),
                              jnp.float32(-1.0))

    def body(i, far):                                    # far: (B, 1) i32
        # Direct per-step scatter of the current farthest index.
        cent_ref[i] = far

        lane = lax.broadcasted_iota(jnp.int32, (B, Np), 1)
        x = pos_ref[0]                                   # (B, Np)
        y = pos_ref[1]
        z = pos_ref[2]

        # Gather the 3 centroid coordinates (one-hot reduce per plane; exact).
        onehot = (lane == far).astype(jnp.float32)       # (B, Np)
        cx = jnp.sum(x * onehot, axis=1, keepdims=True)  # (B, 1)
        cy = jnp.sum(y * onehot, axis=1, keepdims=True)
        cz = jnp.sum(z * onehot, axis=1, keepdims=True)

        # Squared distance to the current centroid: 3 coordinate planes only,
        # same summation order as the reference (no ||p||^2 expansion, which
        # could perturb argmax tie-breaking).
        dx = x - cx
        dy = y - cy
        dz = z - cz
        d = dx * dx + dy * dy + dz * dz                  # (B, Np)

        dist = jnp.minimum(dist_ref[...], d)
        dist_ref[...] = dist

        # argmax (first occurrence) along the lane axis.
        mx = jnp.max(dist, axis=1, keepdims=True)        # (B, 1)
        far_new = jnp.min(jnp.where(dist == mx, lane, Np),
                          axis=1, keepdims=True)
        return far_new.astype(jnp.int32)

    lax.fori_loop(0, npoint, body, start_ref[...])


def fps_pallas(pos, ratio, start_idx):
    """pos: (B, N, 3) float, start_idx: (B,) int -> (B, npoint) int32."""
    B, N, C = pos.shape
    assert C == 3, "FPS expects 3-D coordinates"
    npoint = int(N * ratio)
    Np = ((N + 127) // 128) * 128

    # (B, N, 3) -> (3, B, N): coordinate planes, points on the lane axis.
    pos_t = jnp.transpose(pos, (2, 0, 1)).astype(jnp.float32)
    if Np != N:
        pos_t = jnp.pad(pos_t, ((0, 0), (0, 0), (0, Np - N)))
    start = start_idx.astype(jnp.int32).reshape(B, 1)

    # Rough VMEM budget: pos planes + dist scratch + centroid rows + headroom.
    sub_b = ((B + 7) // 8) * 8
    est = 4 * (3 * sub_b * Np + sub_b * Np) + npoint * 8 * 128 * 4 + (2 << 20)
    compiler_params = None
    if est > (16 << 20):   # raise the scoped-VMEM default (16 MiB on v5e)
        compiler_params = pltpu.CompilerParams(
            vmem_limit_bytes=int(min(est, 112 << 20)))

    kernel = functools.partial(_fps_kernel, npoint=npoint, n_valid=N)
    cent = pl.pallas_call(
        kernel,
        out_shape=jax.ShapeDtypeStruct((npoint, B, 1), jnp.int32),
        in_specs=[
            pl.BlockSpec(memory_space=pltpu.MemorySpace.VMEM),
            pl.BlockSpec(memory_space=pltpu.MemorySpace.VMEM),
        ],
        out_specs=pl.BlockSpec(memory_space=pltpu.MemorySpace.VMEM),
        scratch_shapes=[pltpu.VMEM((B, Np), jnp.float32)],
        compiler_params=compiler_params,
    )(pos_t, start)
    return jnp.transpose(cent[:, :, 0], (1, 0))          # (B, npoint) int32


class FPS:
    def __init__(self, ratio, random_first):
        self.ratio = ratio
        # TODO(synk): `random_first` is unused in the torch forward as well.
        self.random_first = random_first

    def __call__(self, pos, start_idx):
        return fps_pallas(pos, self.ratio, start_idx)


def fps_reference(pos, ratio, start_idx):
    """Pure numpy port of fps_python with an explicit first index."""
    pos = np.asarray(pos, np.float32)
    B, N, _ = pos.shape
    npoint = int(N * ratio)
    centroids = np.zeros((B, npoint), np.int32)
    distance = np.full((B, N), 1e10, np.float32)
    farthest = np.asarray(start_idx, np.int64).copy()
    batch = np.arange(B)
    for i in range(npoint):
        centroids[:, i] = farthest
        centroid = pos[batch, farthest, :][:, None, :]
        dist = np.sum((pos - centroid) ** 2, -1).astype(np.float32)
        distance = np.minimum(distance, dist)
        farthest = np.argmax(distance, -1)
    return centroids


if __name__ == "__main__":
    key = jax.random.PRNGKey(0)
    k_pos, k_start = jax.random.split(key)
    B, N, C = 2, 128, 3
    ratio = 0.25

    pos = jax.random.normal(k_pos, (B, N, C), dtype=jnp.float32)
    # torch uses torch.randint(0, N, (B,)); generated deterministically here.
    start_idx = jax.random.randint(k_start, (B,), 0, N, dtype=jnp.int32)

    fps = FPS(ratio=ratio, random_first=True)
    out = jax.block_until_ready(fps(pos, start_idx))

    ref = fps_reference(np.asarray(pos), ratio, np.asarray(start_idx))
    assert out.shape == (B, int(N * ratio)), out.shape
    assert np.array_equal(np.asarray(out), ref), (np.asarray(out), ref)
    print("KERNEL_OK")
</pallas_src>

<mosaic_0001>
module attributes {stable_mosaic.version = 11 : i64} {
  func.func @_fps_kernel(%arg0: memref<3x2x128xf32, #tpu.memory_space<vmem>>, %arg1: memref<2x1xi32, #tpu.memory_space<vmem>>, %arg2: memref<32x2x1xi32, #tpu.memory_space<vmem>>, %arg3: memref<2x128xf32, #tpu.memory_space<vmem>>) attributes {dimension_semantics = [], scalar_prefetch = 0 : i64, scratch_operands = 1 : i64, tpu.core_type = #tpu.core_type<tc>} {
    %0 = tpu.iota {dimensions = array<i32: 1>} : vector<2x128xi32>
    %c128_i32 = arith.constant 128 : i32
    %1 = vector.broadcast %c128_i32 : i32 to vector<2x128xi32>
    %2 = arith.cmpi slt, %0, %1 : vector<2x128xi32>
    %cst = arith.constant 1.000000e+10 : f32
    %cst_0 = arith.constant -1.000000e+00 : f32
    %3 = vector.broadcast %cst : f32 to vector<2x128xf32>
    %4 = vector.broadcast %cst_0 : f32 to vector<2x128xf32>
    %5 = arith.select %2, %3, %4 : vector<2x128xi1>, vector<2x128xf32>
    %c0 = arith.constant 0 : index
    %c0_1 = arith.constant 0 : index
    %6 = vector.load %arg3[%c0, %c0_1] : memref<2x128xf32, #tpu.memory_space<vmem>>, vector<2x128xf32>
    tpu.vector_store %arg3[%c0, %c0_1], %5 {strides = array<i32>} : memref<2x128xf32, #tpu.memory_space<vmem>>, vector<2x128xf32>,
    %c0_2 = arith.constant 0 : index
    %c0_3 = arith.constant 0 : index
    %7 = vector.load %arg1[%c0_2, %c0_3] : memref<2x1xi32, #tpu.memory_space<vmem>>, vector<2x1xi32>
    %c0_i32 = arith.constant 0 : i32
    %c32_i32 = arith.constant 32 : i32
    %8 = arith.addi %c0_i32, %c32_i32 : i32
    %c1_i32 = arith.constant 1 : i32
    %9 = scf.for %arg4 = %c0_i32 to %8 step %c1_i32 iter_args(%arg5 = %7) -> (vector<2x1xi32>)  : i32 {
      %10 = arith.index_cast %arg4 : i32 to index
      %c0_5 = arith.constant 0 : index
      %c0_6 = arith.constant 0 : index
      %11 = vector.load %arg2[%10, %c0_5, %c0_6] : memref<32x2x1xi32, #tpu.memory_space<vmem>>, vector<1x2x1xi32>
      %12 = vector.shape_cast %11 : vector<1x2x1xi32> to vector<2x1xi32>
      %13 = vector.shape_cast %arg5 : vector<2x1xi32> to vector<1x2x1xi32>
      tpu.vector_store %arg2[%10, %c0_5, %c0_6], %13 {strides = array<i32>} : memref<32x2x1xi32, #tpu.memory_space<vmem>>, vector<1x2x1xi32>,
      %14 = tpu.iota {dimensions = array<i32: 1>} : vector<2x128xi32>
      %c0_7 = arith.constant 0 : index
      %c0_8 = arith.constant 0 : index
      %c0_9 = arith.constant 0 : index
      %15 = vector.load %arg0[%c0_7, %c0_8, %c0_9] : memref<3x2x128xf32, #tpu.memory_space<vmem>>, vector<1x2x128xf32>
      %16 = vector.shape_cast %15 : vector<1x2x128xf32> to vector<2x128xf32>
      %c1 = arith.constant 1 : index
      %c0_10 = arith.constant 0 : index
      %c0_11 = arith.constant 0 : index
      %17 = vector.load %arg0[%c1, %c0_10, %c0_11] : memref<3x2x128xf32, #tpu.memory_space<vmem>>, vector<1x2x128xf32>
      %18 = vector.shape_cast %17 : vector<1x2x128xf32> to vector<2x128xf32>
      %c2 = arith.constant 2 : index
      %c0_12 = arith.constant 0 : index
      %c0_13 = arith.constant 0 : index
      %19 = vector.load %arg0[%c2, %c0_12, %c0_13] : memref<3x2x128xf32, #tpu.memory_space<vmem>>, vector<1x2x128xf32>
      %20 = vector.shape_cast %19 : vector<1x2x128xf32> to vector<2x128xf32>
      %21 = vector.broadcast %arg5 : vector<2x1xi32> to vector<2x128xi32>
      %22 = arith.cmpi eq, %14, %21 : vector<2x128xi32>
      %23 = arith.extui %22 : vector<2x128xi1> to vector<2x128xi32>
      %24 = arith.sitofp %23 : vector<2x128xi32> to vector<2x128xf32>
      %25 = arith.mulf %16, %24 : vector<2x128xf32>
      %cst_14 = arith.constant dense<0.000000e+00> : vector<2xf32>
      %26 = vector.multi_reduction <add>, %25, %cst_14 [1] : vector<2x128xf32> to vector<2xf32>
      %27 = vector.shape_cast %26 : vector<2xf32> to vector<2x1xf32>
      %28 = arith.mulf %18, %24 : vector<2x128xf32>
      %cst_15 = arith.constant dense<0.000000e+00> : vector<2xf32>
      %29 = vector.multi_reduction <add>, %28, %cst_15 [1] : vector<2x128xf32> to vector<2xf32>
      %30 = vector.shape_cast %29 : vector<2xf32> to vector<2x1xf32>
      %31 = arith.mulf %20, %24 : vector<2x128xf32>
      %cst_16 = arith.constant dense<0.000000e+00> : vector<2xf32>
      %32 = vector.multi_reduction <add>, %31, %cst_16 [1] : vector<2x128xf32> to vector<2xf32>
      %33 = vector.shape_cast %32 : vector<2xf32> to vector<2x1xf32>
      %34 = vector.broadcast %27 : vector<2x1xf32> to vector<2x128xf32>
      %35 = arith.subf %16, %34 : vector<2x128xf32>
      %36 = vector.broadcast %30 : vector<2x1xf32> to vector<2x128xf32>
      %37 = arith.subf %18, %36 : vector<2x128xf32>
      %38 = vector.broadcast %33 : vector<2x1xf32> to vector<2x128xf32>
      %39 = arith.subf %20, %38 : vector<2x128xf32>
      %40 = arith.mulf %35, %35 : vector<2x128xf32>
      %41 = arith.mulf %37, %37 : vector<2x128xf32>
      %42 = arith.addf %40, %41 : vector<2x128xf32>
      %43 = arith.mulf %39, %39 : vector<2x128xf32>
      %44 = arith.addf %42, %43 : vector<2x128xf32>
      %c0_17 = arith.constant 0 : index
      %c0_18 = arith.constant 0 : index
      %45 = vector.load %arg3[%c0_17, %c0_18] : memref<2x128xf32, #tpu.memory_space<vmem>>, vector<2x128xf32>
      %46 = arith.minimumf %45, %44 : vector<2x128xf32>
      %c0_19 = arith.constant 0 : index
      %c0_20 = arith.constant 0 : index
      %47 = vector.load %arg3[%c0_19, %c0_20] : memref<2x128xf32, #tpu.memory_space<vmem>>, vector<2x128xf32>
      tpu.vector_store %arg3[%c0_19, %c0_20], %46 {strides = array<i32>} : memref<2x128xf32, #tpu.memory_space<vmem>>, vector<2x128xf32>,
      %cst_21 = arith.constant dense<0xFF800000> : vector<2xf32>
      %48 = vector.multi_reduction <maximumf>, %46, %cst_21 [1] : vector<2x128xf32> to vector<2xf32>
      %49 = vector.shape_cast %48 : vector<2xf32> to vector<2x1xf32>
      %50 = vector.broadcast %49 : vector<2x1xf32> to vector<2x128xf32>
      %51 = arith.cmpf oeq, %46, %50 : vector<2x128xf32>
      %c128_i32_22 = arith.constant 128 : i32
      %52 = vector.broadcast %c128_i32_22 : i32 to vector<2x128xi32>
      %53 = arith.select %51, %14, %52 : vector<2x128xi1>, vector<2x128xi32>
      %cst_23 = arith.constant dense<2147483647> : vector<2xi32>
      %54 = vector.multi_reduction <minsi>, %53, %cst_23 [1] : vector<2x128xi32> to vector<2xi32>
      %55 = vector.shape_cast %54 : vector<2xi32> to vector<2x1xi32>
      scf.yield %55 : vector<2x1xi32>
    }
    %c32_i32_4 = arith.constant 32 : i32
    return
  }
}

</mosaic_0001>

<llo_original>
// kernel: tpu_custom_call.1
$region0: #{tpu_custom_call.1}
  #allocation0 [shape = 'u32[]', space=smem, size = 0x4, offset = 0x4, fixed_abs, tag = 'smem constant byte address 0x4 - core index']
  #allocation1 [shape = 'u32[144,128]{1,0:T(1,128)}', space=vmem, size = 0x12000, scoped, tag = 'internal scratch']
  #allocation2 [shape = 'f32[2,128]{1,0:T(2,128)}', space=vmem, size = 0x400, scoped, tag = 'scratch operand']
  %s0 = inlined_call_operand.hbm [shape: f32[3,2,128], index: 0, kind: input, shape index: {}]
  %s1 = inlined_call_operand.vmem [shape: s32[2,1], index: 1, kind: input, shape index: {}]
  %s2 = inlined_call_operand.vmem [shape: s32[32,2,1], index: 2, kind: output, shape index: {}]
  %s3 = sld [smem:[#allocation0]]
  $region29: #{tpu_custom_call.1} parent=0
    _
  %s5 = ssub.s32 1, %s3
  %s6 = scalar_select 0, %s5, %s3
  $region1: #{tpu_custom_call.1} parent=0
    #allocation3 [shape = 'u8[3072]{0}', space=vmem, size = 0xc00, scoped, tag = 'input window, operand 0, single buffered']
    #allocation4 [shape = 's32[1]{0}', space=sflag, size = 0x4, scoped, tag = 'scoped memory for tpu_custom_call.1']
    %7 = vsyncpa [#allocation4], 0
    // Predicated region
    $region2: #{tpu_custom_call.1} parent=1 // pred_check
      _
    $region3: #{tpu_custom_call.1} parent=1 // pred_check_branch
      %9 = sbr.rel (0) target = $region5
    $region4: #{tpu_custom_call.1} parent=1 // pred_region
      %s11 = ssub.s32 96, 96
      %12 = vsyncadd [#allocation4], %s11
      %s13 = sshll.u32 [#allocation3], 4
      %s14 = int_to_ptr.vmem [resolvable:$true] %s13
      %19 = dma.hbm_to_vmem [thread:$0]  %s0, 96, %s14, [#allocation4], 32, 32, 2
    $region5: #{tpu_custom_call.1} parent=1 // pred_fallthru
      _
    // Predicated region
    $region6: #{tpu_custom_call.1} parent=1 // pred_check
      _
    $region7: #{tpu_custom_call.1} parent=1 // pred_check_branch
      %21 = sbr.rel (0) target = $region9
    $region8: #{tpu_custom_call.1} parent=1 // pred_region
      _
    $region9: #{tpu_custom_call.1} parent=1 // pred_fallthru
      _
    // Predicated region
    $region10: #{tpu_custom_call.1} parent=1 // pred_check
      _
    $region11: #{tpu_custom_call.1} parent=1 // pred_check_branch
      %23 = sbr.rel (0) target = $region13
    $region12: #{tpu_custom_call.1} parent=1 // pred_region
      %24 = dma.done [#allocation4], 96
    $region13: #{tpu_custom_call.1} parent=1 // pred_fallthru
      _
    %v25 = vlaneseq
    %v26 = vand.u32 %v25, 127
    %vm27 = vcmp.lt.s32.totalorder %v26, 128
    %v28 = vsel %vm27, 1e+10, -1.0
    %29 = vst [vmem:[#allocation2] sm:$0x3] %v28
    %v30 = vld [vmem:[%s1] sm:$0x3]
    loop: start=0, step=1, limit=32
    $region14: #{tpu_custom_call.1} parent=1 // loop_pre_header
      _
    $region15: #{tpu_custom_call.1} parent=1 // loop_header
      %s32 = sphi 0, %s36
      %p33 = scmp.ge.s32.totalorder %s32, 32
      %v37 = vphi %v30, %v96
    $region16: #{tpu_custom_call.1} parent=1 // loop_header_branch
      %35 = sbr.rel (%p33) target = $region20
    $region17: #{tpu_custom_call.1} parent=1 // loop_body
      %s38 = smul.u32 %s32, 2
      %s39 = scalar_lea.vmem %s2, %s38
      %vm40 = vcmask 1024
      %41 = vst.msk [vmem:[%s39] sm:$0x3] %vm40, %v37
      %v42 = vld [vmem:[#allocation3] sm:$0x3]
      %s43 = scalar_lea.vmem [#allocation3], 2
      %v44 = vld [vmem:[%s43] sm:$0x3]
      %s45 = scalar_lea.vmem [#allocation3], 4
      %v46 = vld [vmem:[%s45] sm:$0x3]
      %47 = vset.pattern.permute.xlu0 0
      %48 = vperm.xlu0 %47, %v37
      %v49 = vpop.permute.xlu0 %48
      %vm50 = vcmp.eq.s32.totalorder %v26, %v49
      %v51 = vsel %vm50, 1, 0
      %v52 = vcvt.s32.f32 %v51
      %v53 = vmul.f32 %v42, %v52
      %vm54 = vcmask 1041408
      %v55 = vsel %vm54, %v53, 0.0
      %56 = vadd.xlane.f32.xlu0 %v55
      %v57 = vpop.xlane.xlu0 %56
      %v58 = vmul.f32 %v44, %v52
      %v59 = vsel %vm54, %v58, 0.0
      %60 = vadd.xlane.f32.xlu0 %v59
      %v61 = vpop.xlane.xlu0 %60
      %v62 = vmul.f32 %v46, %v52
      %v63 = vsel %vm54, %v62, 0.0
      %64 = vadd.xlane.f32.xlu0 %v63
      %v65 = vpop.xlane.xlu0 %64
      %v66 = vsub.f32 %v42, %v57
      %v67 = vsub.f32 %v44, %v61
      %v68 = vsub.f32 %v46, %v65
      %v69 = vmul.f32 %v66, %v66
      %v70 = vmul.f32 %v67, %v67
      %v71 = vadd.f32 %v69, %v70
      %v72 = vmul.f32 %v68, %v68
      %v73 = vadd.f32 %v71, %v72
      %v74 = vld [vmem:[#allocation2] sm:$0x3]
      %v75 = vmin.f32 %v74, %v73
      %76 = vst [vmem:[#allocation2] sm:$0x3] %v75
      %v77 = vsel %vm54, %v75, -inf
      %78 = vmax.xlane.f32.xlu0 %v77
      %v79 = vpop.xlane.xlu0 %78
      %vm80 = vcmp.eq.f32.partialorder %v75, %v79
      %v81 = vsel %vm80, %v26, 128
      %v82 = vsel %vm54, %v81, 2147483647
      %v83 = vand.u32 %v82, 65535
      %v84 = vshra.s32 %v82, 16
      %v85 = vcvt.s32.f32 %v83
      %v86 = vcvt.s32.f32 %v84
      %87 = vmin.xlane.f32.xlu0 %v86
      %v88 = vpop.xlane.xlu0 %87
      %vm89 = vcmp.eq.f32.partialorder %v86, %v88
      %v90 = vsel %vm89, %v85, inf
      %91 = vmin.xlane.f32.xlu0 %v90
      %v92 = vpop.xlane.xlu0 %91
      %v93 = vcvt.f32.s32 %v92
      %v94 = vcvt.f32.s32 %v88
      %v95 = vshll.u32 %v94, 16
      %v96 = vadd.s32 %v95, %v93
    $region18: #{tpu_custom_call.1} parent=1 // loop_footer
      %s36 = sadd.s32 1, %s32
    $region19: #{tpu_custom_call.1} parent=1 // loop_footer_branch
      %31 = sbr.rel target = $region15
    $region20: #{tpu_custom_call.1} parent=1 // loop_exit
      _
    // Predicated region
    $region21: #{tpu_custom_call.1} parent=1 // pred_check
      _
    $region22: #{tpu_custom_call.1} parent=1 // pred_check_branch
      %98 = sbr.rel (0) target = $region24
    $region23: #{tpu_custom_call.1} parent=1 // pred_region
      _
    $region24: #{tpu_custom_call.1} parent=1 // pred_fallthru
      _
    // Predicated region
    $region25: #{tpu_custom_call.1} parent=1 // pred_check
      _
    $region26: #{tpu_custom_call.1} parent=1 // pred_check_branch
      %100 = sbr.rel (0) target = $region28
    $region27: #{tpu_custom_call.1} parent=1 // pred_region
      _
    $region28: #{tpu_custom_call.1} parent=1 // pred_fallthru
      _
    %101 = vsyncpa [#allocation4], 1

</llo_original>
